<compile_context>
chip_gen: v7x
topology: tpu7x:2x2x1
jax: 0.10.0
libtpu: 0.0.40
codegen_flags: <defaults>
</compile_context>

<pallas_src>
import functools
import math

import jax
import jax.numpy as jnp
from jax.experimental import pallas as pl
from jax.experimental.pallas import tpu as pltpu


_VMEM_PIPELINE_BUDGET = 24 << 20   # bytes for double-buffered I/O + f32 temporaries
_VMEM_LIMIT_BYTES = 40 << 20       # scoped VMEM limit (safe on v5e/v6e/v7x)


def _slc_kernel(x_ref, y_ref, g_ref, b_ref, o_ref, *, size, eps):
    """Rows on sublanes, full hidden dim D on lanes (block last dim == D)."""
    # Residual add in f32 (cast each operand first so bf16 inputs don't lose bits).
    z = x_ref[...].astype(jnp.float32) + y_ref[...].astype(jnp.float32)

    # One-pass statistics: sum and sum-of-squares over the lane (feature) axis.
    s1 = jnp.sum(z, axis=-1, keepdims=True)
    s2 = jnp.sum(z * z, axis=-1, keepdims=True)
    mean = s1 * jnp.float32(1.0 / size)
    denom = max(size - 1, 1)                                   # guard D == 1
    var = (s2 - s1 * mean) * jnp.float32(1.0 / denom)          # unbiased (n-1)
    var = jnp.maximum(var, jnp.float32(0.0))                   # guard cancellation
    # eps is added to std (not variance), matching torch: a_2*(z-mean)/(std+eps)+b_2.
    inv = jnp.float32(1.0) / (jnp.sqrt(var) + jnp.float32(eps))  # exact, per-row

    out = (z - mean) * inv * g_ref[...].astype(jnp.float32) \
        + b_ref[...].astype(jnp.float32)
    o_ref[...] = out.astype(o_ref.dtype)    # dropout: eval mode => identity


def _pick_row_tile(rows, lane, itemsize):
    """Row-tile for the 1-D grid.  Fixed tile + cdiv grid (ragged last block is
    masked by Pallas); tile bounded by the VMEM budget, the ~512-1024 row
    roofline knee, and a floor that keeps the grid >= ~8 steps."""
    # Per-row bytes: 2 pipeline buffers x (2 inputs + 1 output) in the I/O dtype
    # plus ~6 float32 temporaries inside the body (z, z*z, z-mean, scaled, out, slack).
    per_row = lane * (6 * itemsize + 6 * 4)
    vmem_cap = max(8, (_VMEM_PIPELINE_BUDGET // per_row) // 8 * 8)
    tile = min(1024, vmem_cap, max(256, pl.cdiv(rows, 8)))
    tile = max(8, (tile // 8) * 8)          # sublane-aligned block
    if rows <= tile:
        return rows                         # single full-extent block (always legal)
    return tile


def sublayer_connection(x, sublayer_out, gamma, beta, *, eps=1e-6, dropout_p=0.0):
    """x, sublayer_out: (..., D); gamma, beta: (D,). Returns same shape as x.

    dropout_p is accepted for API parity but unused (eval-mode identity).
    """
    del dropout_p  # TODO(synk): training-mode dropout not implemented.
    orig_shape = x.shape
    D = orig_shape[-1]
    rows = math.prod(orig_shape[:-1])
    dtype = x.dtype
    itemsize = jnp.dtype(dtype).itemsize

    x2 = x.reshape(rows, D)
    y2 = sublayer_out.reshape(rows, D)
    g2 = gamma.reshape(1, D).astype(jnp.float32)
    b2 = beta.reshape(1, D).astype(jnp.float32)

    row_tile = _pick_row_tile(rows, D, itemsize)
    grid = (pl.cdiv(rows, row_tile),)

    kernel = functools.partial(_slc_kernel, size=D, eps=eps)

    out2 = pl.pallas_call(
        kernel,
        out_shape=jax.ShapeDtypeStruct((rows, D), dtype),
        grid_spec=pltpu.PrefetchScalarGridSpec(
            num_scalar_prefetch=0,
            grid=grid,
            in_specs=[
                pl.BlockSpec((row_tile, D), lambda i: (i, 0)),
                pl.BlockSpec((row_tile, D), lambda i: (i, 0)),
                pl.BlockSpec((1, D), lambda i: (0, 0)),
                pl.BlockSpec((1, D), lambda i: (0, 0)),
            ],
            out_specs=pl.BlockSpec((row_tile, D), lambda i: (i, 0)),
        ),
        compiler_params=pltpu.CompilerParams(
            dimension_semantics=("parallel",),      # shardable across v7x's 2 TCs
            vmem_limit_bytes=_VMEM_LIMIT_BYTES),
        cost_estimate=pl.CostEstimate(
            flops=10 * rows * D,
            transcendentals=2 * rows,
            bytes_accessed=3 * rows * D * itemsize),
    )(x2, y2, g2, b2)

    return out2.reshape(orig_shape)


def _reference(x, y, gamma, beta, eps=1e-6):
    z = x + y
    mean = jnp.mean(z, axis=-1, keepdims=True)
    d = z - mean
    var = jnp.sum(d * d, axis=-1, keepdims=True) / (z.shape[-1] - 1)
    std = jnp.sqrt(var)
    return gamma * d / (std + eps) + beta


if __name__ == "__main__":
    key = jax.random.PRNGKey(0)

    # Small shapes consistent with the module's (batch, seq, hidden) usage.
    # (3, 5, 48) exercises a ragged row count and a non-multiple-of-128 hidden dim.
    cases = [(2, 8, 32), (2, 8, 128), (3, 5, 48)]

    for (B, S, D) in cases:
        k_x, k_w, k_g, k_b = jax.random.split(jax.random.fold_in(key, D), 4)
        x = jax.random.normal(k_x, (B, S, D), dtype=jnp.float32)

        # Deterministic synthetic "sublayer": a simple linear map (plain-JAX glue;
        # the sublayer is an external callable in the PyTorch module).
        W = jax.random.normal(k_w, (D, D), dtype=jnp.float32) * 0.05
        y = jnp.einsum("bsd,de->bse", x, W)

        # LayerNorm parameters (learnable a_2 / b_2 in the module).
        gamma = 1.0 + 0.1 * jax.random.normal(k_g, (D,), dtype=jnp.float32)
        beta = 0.1 * jax.random.normal(k_b, (D,), dtype=jnp.float32)

        out = jax.block_until_ready(
            sublayer_connection(x, y, gamma, beta, dropout_p=0.1))
        ref = _reference(x, y, gamma, beta)

        assert out.shape == x.shape, f"shape mismatch (D={D})"
        assert jnp.allclose(out, ref, atol=1e-4, rtol=1e-4), \
            f"mismatch vs reference (B={B}, S={S}, D={D})"

    print("KERNEL_OK")
</pallas_src>

<mosaic_0001>
module attributes {stable_mosaic.version = 11 : i64} {
  func.func @_slc_kernel(%arg0: i32, %arg1: memref<16x32xf32, #tpu.memory_space<vmem>>, %arg2: memref<16x32xf32, #tpu.memory_space<vmem>>, %arg3: memref<1x32xf32, #tpu.memory_space<vmem>>, %arg4: memref<1x32xf32, #tpu.memory_space<vmem>>, %arg5: memref<16x32xf32, #tpu.memory_space<vmem>>) attributes {dimension_semantics = [#tpu.dimension_semantics<parallel>], iteration_bounds = array<i64: 1>, scalar_prefetch = 0 : i64, scratch_operands = 0 : i64, tpu.core_type = #tpu.core_type<tc>, window_params = [{transform_indices = @transform_0, window_bounds = array<i64: 16, 32>}, {transform_indices = @transform_1, window_bounds = array<i64: 16, 32>}, {pipeline_mode = #tpu.pipeline_mode<synchronous>, transform_indices = @transform_2, window_bounds = array<i64: 1, 32>}, {pipeline_mode = #tpu.pipeline_mode<synchronous>, transform_indices = @transform_3, window_bounds = array<i64: 1, 32>}, {transform_indices = @transform_4, window_bounds = array<i64: 16, 32>}]} {
    %c0 = arith.constant 0 : index
    %c0_0 = arith.constant 0 : index
    %0 = vector.load %arg1[%c0, %c0_0] : memref<16x32xf32, #tpu.memory_space<vmem>>, vector<16x32xf32>
    %c0_1 = arith.constant 0 : index
    %c0_2 = arith.constant 0 : index
    %1 = vector.load %arg2[%c0_1, %c0_2] : memref<16x32xf32, #tpu.memory_space<vmem>>, vector<16x32xf32>
    %2 = arith.addf %0, %1 : vector<16x32xf32>
    %cst = arith.constant dense<0.000000e+00> : vector<16xf32>
    %3 = vector.multi_reduction <add>, %2, %cst [1] : vector<16x32xf32> to vector<16xf32>
    %4 = vector.shape_cast %3 : vector<16xf32> to vector<16x1xf32>
    %5 = arith.mulf %2, %2 : vector<16x32xf32>
    %cst_3 = arith.constant dense<0.000000e+00> : vector<16xf32>
    %6 = vector.multi_reduction <add>, %5, %cst_3 [1] : vector<16x32xf32> to vector<16xf32>
    %7 = vector.shape_cast %6 : vector<16xf32> to vector<16x1xf32>
    %cst_4 = arith.constant 3.125000e-02 : f32
    %8 = vector.broadcast %cst_4 : f32 to vector<16x1xf32>
    %9 = arith.mulf %4, %8 : vector<16x1xf32>
    %10 = arith.mulf %4, %9 : vector<16x1xf32>
    %11 = arith.subf %7, %10 : vector<16x1xf32>
    %cst_5 = arith.constant 0.0322580636 : f32
    %12 = vector.broadcast %cst_5 : f32 to vector<16x1xf32>
    %13 = arith.mulf %11, %12 : vector<16x1xf32>
    %cst_6 = arith.constant 0.000000e+00 : f32
    %14 = vector.broadcast %cst_6 : f32 to vector<16x1xf32>
    %15 = arith.maximumf %13, %14 : vector<16x1xf32>
    %16 = math.sqrt %15 : vector<16x1xf32>
    %cst_7 = arith.constant 9.99999997E-7 : f32
    %17 = vector.broadcast %cst_7 : f32 to vector<16x1xf32>
    %18 = arith.addf %16, %17 : vector<16x1xf32>
    %cst_8 = arith.constant 1.000000e+00 : f32
    %19 = vector.broadcast %cst_8 : f32 to vector<16x1xf32>
    %20 = arith.divf %19, %18 : vector<16x1xf32>
    %21 = vector.broadcast %9 : vector<16x1xf32> to vector<16x32xf32>
    %22 = arith.subf %2, %21 : vector<16x32xf32>
    %23 = vector.broadcast %20 : vector<16x1xf32> to vector<16x32xf32>
    %24 = arith.mulf %22, %23 : vector<16x32xf32>
    %c0_9 = arith.constant 0 : index
    %c0_10 = arith.constant 0 : index
    %25 = vector.load %arg3[%c0_9, %c0_10] : memref<1x32xf32, #tpu.memory_space<vmem>>, vector<1x32xf32>
    %26 = vector.broadcast %25 : vector<1x32xf32> to vector<16x32xf32>
    %27 = arith.mulf %24, %26 : vector<16x32xf32>
    %c0_11 = arith.constant 0 : index
    %c0_12 = arith.constant 0 : index
    %28 = vector.load %arg4[%c0_11, %c0_12] : memref<1x32xf32, #tpu.memory_space<vmem>>, vector<1x32xf32>
    %29 = vector.broadcast %28 : vector<1x32xf32> to vector<16x32xf32>
    %30 = arith.addf %27, %29 : vector<16x32xf32>
    %c0_13 = arith.constant 0 : index
    %c0_14 = arith.constant 0 : index
    %31 = vector.load %arg5[%c0_13, %c0_14] : memref<16x32xf32, #tpu.memory_space<vmem>>, vector<16x32xf32>
    tpu.vector_store %arg5[%c0_13, %c0_14], %30 {strides = array<i32>} : memref<16x32xf32, #tpu.memory_space<vmem>>, vector<16x32xf32>,
    return
  }
  func.func @transform_0(%arg0: i32) -> (i32, i32) {
    %c0_i32 = arith.constant 0 : i32
    %c0_i32_0 = arith.constant 0 : i32
    return %arg0, %c0_i32 : i32, i32
  }
  func.func @transform_1(%arg0: i32) -> (i32, i32) {
    %c0_i32 = arith.constant 0 : i32
    %c0_i32_0 = arith.constant 0 : i32
    return %arg0, %c0_i32 : i32, i32
  }
  func.func @transform_2(%arg0: i32) -> (i32, i32) {
    %c0_i32 = arith.constant 0 : i32
    %c0_i32_0 = arith.constant 0 : i32
    %c0_i32_1 = arith.constant 0 : i32
    return %c0_i32, %c0_i32_0 : i32, i32
  }
  func.func @transform_3(%arg0: i32) -> (i32, i32) {
    %c0_i32 = arith.constant 0 : i32
    %c0_i32_0 = arith.constant 0 : i32
    %c0_i32_1 = arith.constant 0 : i32
    return %c0_i32, %c0_i32_0 : i32, i32
  }
  func.func @transform_4(%arg0: i32) -> (i32, i32) {
    %c0_i32 = arith.constant 0 : i32
    %c0_i32_0 = arith.constant 0 : i32
    return %arg0, %c0_i32 : i32, i32
  }
}

</mosaic_0001>

<llo_original>
// kernel: tpu_custom_call.1
$region0: #{tpu_custom_call.1}
  #allocation0 [shape = 'u32[]', space=smem, size = 0x4, offset = 0x4, fixed_abs, tag = 'smem constant byte address 0x4 - core index']
  #allocation1 [shape = 'u32[144,128]{1,0:T(1,128)}', space=vmem, size = 0x12000, scoped, tag = 'internal scratch']
  %s0 = inlined_call_operand.hbm [shape: f32[16,32], index: 0, kind: input, shape index: {}]
  %s1 = inlined_call_operand.hbm [shape: f32[16,32], index: 1, kind: input, shape index: {}]
  %s2 = inlined_call_operand.vmem [shape: f32[1,32], index: 2, kind: input, shape index: {}]
  %s3 = inlined_call_operand.vmem [shape: f32[1,32], index: 3, kind: input, shape index: {}]
  %s4 = inlined_call_operand.hbm [shape: f32[16,32], index: 4, kind: output, shape index: {}]
  %s5 = sld [smem:[#allocation0]]
  $region34: #{tpu_custom_call.1} parent=0
    _
  %s7 = ssub.s32 1, %s5
  %s8 = scalar_select 0, %s7, %s5
  $region1: #{tpu_custom_call.1} parent=0
    #allocation2 [shape = 'u8[8192]{0}', space=vmem, size = 0x2000, scoped, tag = 'input window, operand 0, single buffered']
    #allocation3 [shape = 's32[1]{0}', space=sflag, size = 0x4, scoped, tag = 'scoped memory for tpu_custom_call.1']
    #allocation4 [shape = 's32[1]{0}', space=sflag, size = 0x4, scoped, tag = 'scoped memory for tpu_custom_call.1']
    #allocation5 [shape = 'u8[8192]{0}', space=vmem, size = 0x2000, scoped, tag = 'input window, operand 1, single buffered']
    #allocation6 [shape = 's32[1]{0}', space=sflag, size = 0x4, scoped, tag = 'scoped memory for tpu_custom_call.1']
    #allocation7 [shape = 'u8[8192]{0}', space=vmem, size = 0x2000, scoped, tag = 'output window, operand 0, single buffered']
    %9 = vsyncpa [#allocation3], 0
    %10 = vsyncpa [#allocation6], 0
    %11 = vsyncpa [#allocation4], 0
    // Predicated region
    $region2: #{tpu_custom_call.1} parent=1 // pred_check
      _
    $region3: #{tpu_custom_call.1} parent=1 // pred_check_branch
      %13 = sbr.rel (0) target = $region5
    $region4: #{tpu_custom_call.1} parent=1 // pred_region
      %s15 = ssub.s32 256, 256
      %16 = vsyncadd [#allocation3], %s15
      %s17 = sshll.u32 [#allocation2], 4
      %s18 = int_to_ptr.vmem [resolvable:$true] %s17
      %23 = dma.hbm_to_vmem [thread:$0]  %s0, 256, %s18, [#allocation3], 128, 128, 8
    $region5: #{tpu_custom_call.1} parent=1 // pred_fallthru
      _
    // Predicated region
    $region6: #{tpu_custom_call.1} parent=1 // pred_check
      _
    $region7: #{tpu_custom_call.1} parent=1 // pred_check_branch
      %25 = sbr.rel (0) target = $region9
    $region8: #{tpu_custom_call.1} parent=1 // pred_region
      %s27 = ssub.s32 256, 256
      %28 = vsyncadd [#allocation6], %s27
      %s29 = sshll.u32 [#allocation5], 4
      %s30 = int_to_ptr.vmem [resolvable:$true] %s29
      %35 = dma.hbm_to_vmem [thread:$0]  %s1, 256, %s30, [#allocation6], 128, 128, 8
    $region9: #{tpu_custom_call.1} parent=1 // pred_fallthru
      _
    // Predicated region
    $region10: #{tpu_custom_call.1} parent=1 // pred_check
      _
    $region11: #{tpu_custom_call.1} parent=1 // pred_check_branch
      %37 = sbr.rel (0) target = $region13
    $region12: #{tpu_custom_call.1} parent=1 // pred_region
      _
    $region13: #{tpu_custom_call.1} parent=1 // pred_fallthru
      _
    // Predicated region
    $region14: #{tpu_custom_call.1} parent=1 // pred_check
      _
    $region15: #{tpu_custom_call.1} parent=1 // pred_check_branch
      %39 = sbr.rel (0) target = $region17
    $region16: #{tpu_custom_call.1} parent=1 // pred_region
      _
    $region17: #{tpu_custom_call.1} parent=1 // pred_fallthru
      _
    // Predicated region
    $region18: #{tpu_custom_call.1} parent=1 // pred_check
      _
    $region19: #{tpu_custom_call.1} parent=1 // pred_check_branch
      %41 = sbr.rel (0) target = $region21
    $region20: #{tpu_custom_call.1} parent=1 // pred_region
      %42 = dma.done [#allocation3], 256
    $region21: #{tpu_custom_call.1} parent=1 // pred_fallthru
      _
    // Predicated region
    $region22: #{tpu_custom_call.1} parent=1 // pred_check
      _
    $region23: #{tpu_custom_call.1} parent=1 // pred_check_branch
      %44 = sbr.rel (0) target = $region25
    $region24: #{tpu_custom_call.1} parent=1 // pred_region
      %45 = dma.done [#allocation6], 256
    $region25: #{tpu_custom_call.1} parent=1 // pred_fallthru
      _
    %v46 = vld [vmem:[#allocation2] sm:$0xff]
    %v47 = vld [vmem:[#allocation2 + $0x8] sm:$0xff]
    %v48 = vld [vmem:[#allocation5] sm:$0xff]
    %v49 = vld [vmem:[#allocation5 + $0x8] sm:$0xff]
    %v50 = vadd.f32 %v46, %v48
    %v51 = vadd.f32 %v47, %v49
    %vm52 = vcmask 261120
    %v53 = vsel %vm52, %v50, 0.0
    %54 = vadd.xlane.f32.xlu0 %v53
    %v55 = vpop.xlane.xlu0 %54
    %v56 = vsel %vm52, %v51, 0.0
    %57 = vadd.xlane.f32.xlu0 %v56
    %v58 = vpop.xlane.xlu0 %57
    %v59 = vmul.f32 %v50, %v50
    %v60 = vmul.f32 %v51, %v51
    %v61 = vsel %vm52, %v59, 0.0
    %62 = vadd.xlane.f32.xlu0 %v61
    %v63 = vpop.xlane.xlu0 %62
    %v64 = vsel %vm52, %v60, 0.0
    %65 = vadd.xlane.f32.xlu0 %v64
    %v66 = vpop.xlane.xlu0 %65
    %v67 = vmul.f32 %v55, 0.03125
    %v68 = vmul.f32 %v58, 0.03125
    %v69 = vmul.f32 %v55, %v67
    %v70 = vmul.f32 %v58, %v68
    %v71 = vsub.f32 %v63, %v69
    %v72 = vsub.f32 %v66, %v70
    %v73 = vmul.f32 %v71, 0.032258064
    %v74 = vmul.f32 %v72, 0.032258064
    %v75 = vmax.f32 %v73, 0.0
    %v76 = vmax.f32 %v74, 0.0
    %v77 = vrsqrt.pop %v75
    %v78 = vmul.f32 %v75, %v77
    %vm79 = vcmp.eq.f32.partialorder %v75, inf
    %v80 = vsel %vm79, %v75, %v78
    %vm81 = vcmp.eq.f32.partialorder %v75, 0.0
    %v82 = vand.u32 %v75, 2147483648
    %v83 = vsel %vm81, %v82, %v80
    %v84 = vrsqrt.pop %v76
    %v85 = vmul.f32 %v76, %v84
    %vm86 = vcmp.eq.f32.partialorder %v76, inf
    %v87 = vsel %vm86, %v76, %v85
    %vm88 = vcmp.eq.f32.partialorder %v76, 0.0
    %v89 = vand.u32 %v76, 2147483648
    %v90 = vsel %vm88, %v89, %v87
    %v91 = vadd.f32 %v83, 1e-06
    %v92 = vadd.f32 %v90, 1e-06
    %v93 = vrcp.pop %v91
    %v94 = vmul.f32 1.0, %v93
    %v95 = vrcp.pop %v92
    %v96 = vmul.f32 1.0, %v95
    %v97 = vsub.f32 %v50, %v67
    %v98 = vsub.f32 %v51, %v68
    %v99 = vmul.f32 %v97, %v94
    %v100 = vmul.f32 %v98, %v96
    %v101 = vld [vmem:[%s2] sm:$0x1]
    %v103 = vlaneseq
    %v104 = vshrl.u32 %v103, 7
    %v105 = vsub.s32 0, %v104
    %v106 = vrot.slane %v101, %v105
    %v108 = vmul.f32 %v99, %v106
    %v109 = vmul.f32 %v100, %v106
    %v110 = vld [vmem:[%s3] sm:$0x1]
    %v112 = vlaneseq
    %v113 = vshrl.u32 %v112, 7
    %v114 = vsub.s32 0, %v113
    %v115 = vrot.slane %v110, %v114
    %v117 = vadd.f32 %v108, %v115
    %v118 = vadd.f32 %v109, %v115
    %119 = vst.msk [vmem:[#allocation7] sm:$0xff] %vm52, %v117
    %120 = vst.msk [vmem:[#allocation7 + $0x8] sm:$0xff] %vm52, %v118
    // Predicated region
    $region26: #{tpu_custom_call.1} parent=1 // pred_check
      _
    $region27: #{tpu_custom_call.1} parent=1 // pred_check_branch
      %122 = sbr.rel (0) target = $region29
    $region28: #{tpu_custom_call.1} parent=1 // pred_region
      %s124 = ssub.s32 256, 256
      %125 = vsyncadd [#allocation4], %s124
      %s126 = sshll.u32 [#allocation7], 4
      %s127 = int_to_ptr.vmem [resolvable:$true] %s126
      %132 = dma.vmem_to_hbm [thread:$0]  %s127, 256, %s4, [#allocation4], 128, 128, 8
    $region29: #{tpu_custom_call.1} parent=1 // pred_fallthru
      _
    // Predicated region
    $region30: #{tpu_custom_call.1} parent=1 // pred_check
      _
    $region31: #{tpu_custom_call.1} parent=1 // pred_check_branch
      %134 = sbr.rel (0) target = $region33
    $region32: #{tpu_custom_call.1} parent=1 // pred_region
      %135 = dma.done [#allocation4], 256
    $region33: #{tpu_custom_call.1} parent=1 // pred_fallthru
      _
    %136 = vsyncpa [#allocation3], 1
    %137 = vsyncpa [#allocation6], 1
    %138 = vsyncpa [#allocation4], 1

</llo_original>
